<compile_context>
chip_gen: v7x
topology: tpu7x:2x2x1
jax: 0.10.0
libtpu: 0.0.40
codegen_flags: <defaults>
</compile_context>

<pallas_src>
import jax
import jax.numpy as jnp
from jax.experimental import pallas as pl
from jax.experimental.pallas import tpu as pltpu


# ---------------------------------------------------------------------------
# Kernel 1: one LSTM layer (batch_first), one batch element per grid step.
# ---------------------------------------------------------------------------
def _lstm_layer_kernel(x_ref, wih_ref, whh_ref, b_ref, o_ref, gx_sc, h_sc, c_sc):
    # x_ref : (1, T, Din)   wih_ref: (Din, 4H)   whh_ref: (H, 4H)   b_ref: (1, 4H)
    # o_ref : (1, T, H)     gx_sc: (T, 4H)       h_sc/c_sc: (1, H)
    T = x_ref.shape[1]
    Hd = whh_ref.shape[0]

    # Hoisted input projection for ALL timesteps: one MXU matmul, off the
    # serial chain. Result lives in VMEM scratch, read one row per step.
    x2d = x_ref[0].astype(jnp.float32)                                   # (T, Din)
    gx_sc[...] = (
        jnp.dot(x2d, wih_ref[...], preferred_element_type=jnp.float32)
        + b_ref[...]
    )                                                                    # (T, 4H)

    h_sc[...] = jnp.zeros_like(h_sc)
    c_sc[...] = jnp.zeros_like(c_sc)

    # Static lane mask selecting the "g" gate lanes (PyTorch order: i, f, g, o).
    lane = jax.lax.broadcasted_iota(jnp.int32, (1, 4 * Hd), 1)
    is_g = (lane >= 2 * Hd) & (lane < 3 * Hd)

    @pl.loop(0, T)
    def _(t):
        gates = gx_sc[pl.ds(t, 1), :] + jnp.dot(
            h_sc[...], whh_ref[...], preferred_element_type=jnp.float32)  # (1, 4H)
        # Full-width EUP passes (one sigmoid, one tanh) + lane-mask select.
        act = jnp.where(is_g, jnp.tanh(gates), jax.nn.sigmoid(gates))
        i_g = act[:, 0 * Hd:1 * Hd]
        f_g = act[:, 1 * Hd:2 * Hd]
        g_g = act[:, 2 * Hd:3 * Hd]
        o_g = act[:, 3 * Hd:4 * Hd]
        c_new = f_g * c_sc[...] + i_g * g_g
        h_new = o_g * jnp.tanh(c_new)
        c_sc[...] = c_new
        h_sc[...] = h_new
        o_ref[:, pl.ds(t, 1), :] = jnp.reshape(h_new, (1, 1, Hd)).astype(o_ref.dtype)


def lstm_layer(x_btd, wih_t, whh_t, b):
    """x: (B, T, Din); wih_t: (Din, 4H); whh_t: (H, 4H); b: (1, 4H) -> (B, T, H)."""
    B, T, Din = x_btd.shape
    H = whh_t.shape[0]
    grid_spec = pltpu.PrefetchScalarGridSpec(
        num_scalar_prefetch=0,
        grid=(B,),
        in_specs=[
            pl.BlockSpec((1, T, Din), lambda i: (i, 0, 0)),
            pl.BlockSpec((Din, 4 * H), lambda i: (0, 0)),
            pl.BlockSpec((H, 4 * H), lambda i: (0, 0)),
            pl.BlockSpec((1, 4 * H), lambda i: (0, 0)),
        ],
        out_specs=pl.BlockSpec((1, T, H), lambda i: (i, 0, 0)),
        scratch_shapes=[
            pltpu.VMEM((T, 4 * H), jnp.float32),   # hoisted X@Wih + b
            pltpu.VMEM((1, H), jnp.float32),       # h state
            pltpu.VMEM((1, H), jnp.float32),       # c state
        ],
    )
    return pl.pallas_call(
        _lstm_layer_kernel,
        out_shape=jax.ShapeDtypeStruct((B, T, H), x_btd.dtype),
        grid_spec=grid_spec,
        compiler_params=pltpu.CompilerParams(
            dimension_semantics=("parallel",)),
    )(x_btd, wih_t, whh_t, b)


# ---------------------------------------------------------------------------
# Kernel 2: fused conv1+ReLU -> conv2+ReLU -> maxpool(2,1) -> GAP -> fc1/ReLU
#           -> fc2, channels-last, one batch element per grid step.
# ---------------------------------------------------------------------------
def _cnn_head_kernel(x_ref, w1_ref, b1_ref, w2_ref, b2_ref,
                     fw1_ref, fb1_ref, fw2_ref, fb2_ref, o_ref):
    # x_ref : (1, T, Cin)   w*_ref: (K, Cin, Cout)   b*_ref: (1, Cout)
    # fw1   : (512, 256)    fw2: (256, ncls)         o_ref: (1, 1, ncls)
    x = x_ref[0].astype(jnp.float32)                                     # (T, Cin)
    T = x_ref.shape[1]
    K1, _, C1 = w1_ref.shape
    K2, _, C2 = w2_ref.shape
    L1 = T - K1 + 1
    L2 = L1 - K2 + 1

    # conv1 + relu  (max_pool1d(k=1, s=1) is the identity)
    a1 = jnp.zeros((L1, C1), jnp.float32)
    for k in range(K1):                                                  # static unroll
        a1 = a1 + jnp.dot(x[k:k + L1, :], w1_ref[k],
                          preferred_element_type=jnp.float32)
    a1 = jnp.maximum(a1 + b1_ref[...], 0.0)                              # (L1, 256)

    # conv2 + relu
    a2 = jnp.zeros((L2, C2), jnp.float32)
    for k in range(K2):
        a2 = a2 + jnp.dot(a1[k:k + L2, :], w2_ref[k],
                          preferred_element_type=jnp.float32)
    a2 = jnp.maximum(a2 + b2_ref[...], 0.0)                              # (L2, 512)

    # max_pool1d(kernel_size=2, stride=1) over length
    mp = jnp.maximum(a2[:L2 - 1, :], a2[1:, :])                          # (L2-1, 512)
    # AdaptiveAvgPool1d(1) + squeeze(-1)
    s = jnp.mean(mp, axis=0, keepdims=True)                              # (1, 512)
    # fc1 + relu
    h = jnp.maximum(
        jnp.dot(s, fw1_ref[...], preferred_element_type=jnp.float32) + fb1_ref[...],
        0.0)                                                             # (1, 256)
    # fc2
    out = jnp.dot(h, fw2_ref[...], preferred_element_type=jnp.float32) + fb2_ref[...]
    o_ref[...] = jnp.reshape(out, (1, 1, -1)).astype(o_ref.dtype)


def cnn_head(feat_bth, w1, b1, w2, b2, fw1, fb1, fw2, fb2):
    """feat: (B, T, H) channels-last -> logits (B, num_classes)."""
    B, T, H = feat_bth.shape
    K1, _, C1 = w1.shape
    K2, _, C2 = w2.shape
    F1 = fw1.shape[1]
    ncls = fw2.shape[1]
    grid_spec = pltpu.PrefetchScalarGridSpec(
        num_scalar_prefetch=0,
        grid=(B,),
        in_specs=[
            pl.BlockSpec((1, T, H), lambda i: (i, 0, 0)),
            pl.BlockSpec((K1, H, C1), lambda i: (0, 0, 0)),
            pl.BlockSpec((1, C1), lambda i: (0, 0)),
            pl.BlockSpec((K2, C1, C2), lambda i: (0, 0, 0)),
            pl.BlockSpec((1, C2), lambda i: (0, 0)),
            pl.BlockSpec((C2, F1), lambda i: (0, 0)),
            pl.BlockSpec((1, F1), lambda i: (0, 0)),
            pl.BlockSpec((F1, ncls), lambda i: (0, 0)),
            pl.BlockSpec((1, ncls), lambda i: (0, 0)),
        ],
        out_specs=pl.BlockSpec((1, 1, ncls), lambda i: (i, 0, 0)),
    )
    out3 = pl.pallas_call(
        _cnn_head_kernel,
        out_shape=jax.ShapeDtypeStruct((B, 1, ncls), feat_bth.dtype),
        grid_spec=grid_spec,
        compiler_params=pltpu.CompilerParams(
            dimension_semantics=("parallel",)),
    )(feat_bth, w1, b1, w2, b2, fw1, fb1, fw2, fb2)
    return out3.reshape(B, ncls)


# ---------------------------------------------------------------------------
# Full forward: LSTM stack -> fused CNN/head. No wrapper transposes.
# ---------------------------------------------------------------------------
def lstm_cnn_forward(x, params):
    """x: (B, T, input_dim) -> logits (B, num_classes)."""
    feat = x                                              # (B, T, Din), batch-major
    for (wih_t, whh_t, b) in params["lstm"]:
        feat = lstm_layer(feat, wih_t, whh_t, b)          # (B, T, H)
    # PyTorch's permute(0,2,1) only adapts to Conv1d's NCL layout; our fused
    # CNN/head kernel consumes channels-last directly (lane-dense matmuls).
    return cnn_head(feat,
                    params["conv1_w"], params["conv1_b"],
                    params["conv2_w"], params["conv2_b"],
                    params["fc1_w"], params["fc1_b"],
                    params["fc2_w"], params["fc2_b"])


# ---------------------------------------------------------------------------
# Pure-JAX reference for correctness checking.
# ---------------------------------------------------------------------------
def lstm_cnn_ref(x, params):
    B, T, _ = x.shape
    h_seq = x.astype(jnp.float32)
    for (wih_t, whh_t, b) in params["lstm"]:
        H = whh_t.shape[0]

        def step(carry, x_t):
            h, c = carry
            gates = x_t @ wih_t + h @ whh_t + b[0]
            i = jax.nn.sigmoid(gates[:, 0 * H:1 * H])
            f = jax.nn.sigmoid(gates[:, 1 * H:2 * H])
            g = jnp.tanh(gates[:, 2 * H:3 * H])
            o = jax.nn.sigmoid(gates[:, 3 * H:4 * H])
            c = f * c + i * g
            h = o * jnp.tanh(c)
            return (h, c), h

        init = (jnp.zeros((B, H), jnp.float32), jnp.zeros((B, H), jnp.float32))
        _, hs = jax.lax.scan(step, init, jnp.transpose(h_seq, (1, 0, 2)))
        h_seq = jnp.transpose(hs, (1, 0, 2))              # (B, T, H)

    def conv_relu_ref(xf, w, bias):
        K = w.shape[0]
        Lout = xf.shape[1] - K + 1
        out = jnp.zeros((xf.shape[0], Lout, w.shape[2]), jnp.float32)
        for k in range(K):
            out = out + jnp.einsum("blc,co->blo", xf[:, k:k + Lout, :], w[k])
        return jnp.maximum(out + bias[None], 0.0)

    feat = conv_relu_ref(h_seq, params["conv1_w"], params["conv1_b"])
    feat = conv_relu_ref(feat, params["conv2_w"], params["conv2_b"])
    Lp = feat.shape[1] - 1
    mp = jnp.maximum(feat[:, :Lp, :], feat[:, 1:Lp + 1, :])
    s = jnp.mean(mp, axis=1)
    h = jnp.maximum(s @ params["fc1_w"] + params["fc1_b"], 0.0)
    return h @ params["fc2_w"] + params["fc2_b"]


if __name__ == "__main__":
    # Small shapes consistent with the module.
    B, T = 2, 16
    input_dim, hidden_dim, num_layers, num_classes = 8, 32, 1, 6
    K = 5

    key = jax.random.PRNGKey(0)
    keys = jax.random.split(key, 16)

    x = jax.random.normal(keys[0], (B, T, input_dim), dtype=jnp.float32)

    params = {}
    lstm_params = []
    din = input_dim
    for layer in range(num_layers):
        # Weights pre-transposed for right-multiplication; bias b = b_ih + b_hh.
        wih_t = 0.2 * jax.random.normal(keys[1 + 3 * layer],
                                        (din, 4 * hidden_dim), jnp.float32)
        whh_t = 0.2 * jax.random.normal(keys[2 + 3 * layer],
                                        (hidden_dim, 4 * hidden_dim), jnp.float32)
        b = 0.1 * jax.random.normal(keys[3 + 3 * layer],
                                    (1, 4 * hidden_dim), jnp.float32)
        lstm_params.append((wih_t, whh_t, b))
        din = hidden_dim
    params["lstm"] = lstm_params

    # Conv1d weights in (K, Cin, Cout) layout (torch_w.permute(2,1,0)); fc weights
    # pre-transposed to (in, out).
    params["conv1_w"] = 0.1 * jax.random.normal(keys[7], (K, hidden_dim, 256), jnp.float32)
    params["conv1_b"] = 0.1 * jax.random.normal(keys[8], (1, 256), jnp.float32)
    params["conv2_w"] = 0.05 * jax.random.normal(keys[9], (K, 256, 512), jnp.float32)
    params["conv2_b"] = 0.1 * jax.random.normal(keys[10], (1, 512), jnp.float32)
    params["fc1_w"] = 0.05 * jax.random.normal(keys[11], (512, 256), jnp.float32)
    params["fc1_b"] = 0.1 * jax.random.normal(keys[12], (1, 256), jnp.float32)
    params["fc2_w"] = 0.05 * jax.random.normal(keys[13], (256, num_classes), jnp.float32)
    params["fc2_b"] = 0.1 * jax.random.normal(keys[14], (1, num_classes), jnp.float32)

    out = lstm_cnn_forward(x, params)
    out = jax.block_until_ready(out)

    ref = lstm_cnn_ref(x, params)
    assert out.shape == (B, num_classes)
    assert jnp.allclose(out, ref, atol=5e-3, rtol=5e-2), (
        "mismatch vs reference: max abs diff = "
        f"{float(jnp.max(jnp.abs(out - ref)))}")

    print("KERNEL_OK")
</pallas_src>

<mosaic_0001>
module attributes {stable_mosaic.version = 11 : i64} {
  func.func @_lstm_layer_kernel(%arg0: i32, %arg1: memref<1x16x8xf32, #tpu.memory_space<vmem>>, %arg2: memref<8x128xf32, #tpu.memory_space<vmem>>, %arg3: memref<32x128xf32, #tpu.memory_space<vmem>>, %arg4: memref<1x128xf32, #tpu.memory_space<vmem>>, %arg5: memref<1x16x32xf32, #tpu.memory_space<vmem>>, %arg6: memref<16x128xf32, #tpu.memory_space<vmem>>, %arg7: memref<1x32xf32, #tpu.memory_space<vmem>>, %arg8: memref<1x32xf32, #tpu.memory_space<vmem>>) attributes {dimension_semantics = [#tpu.dimension_semantics<parallel>], iteration_bounds = array<i64: 2>, scalar_prefetch = 0 : i64, scratch_operands = 3 : i64, tpu.core_type = #tpu.core_type<tc>, window_params = [{transform_indices = @transform_0, window_bounds = array<i64: 1, 16, 8>}, {pipeline_mode = #tpu.pipeline_mode<synchronous>, transform_indices = @transform_1, window_bounds = array<i64: 8, 128>}, {pipeline_mode = #tpu.pipeline_mode<synchronous>, transform_indices = @transform_2, window_bounds = array<i64: 32, 128>}, {pipeline_mode = #tpu.pipeline_mode<synchronous>, transform_indices = @transform_3, window_bounds = array<i64: 1, 128>}, {transform_indices = @transform_4, window_bounds = array<i64: 1, 16, 32>}]} {
    %c0 = arith.constant 0 : index
    %c0_0 = arith.constant 0 : index
    %c0_1 = arith.constant 0 : index
    %0 = vector.load %arg1[%c0, %c0_0, %c0_1] : memref<1x16x8xf32, #tpu.memory_space<vmem>>, vector<1x16x8xf32>
    %1 = vector.shape_cast %0 : vector<1x16x8xf32> to vector<16x8xf32>
    %c0_2 = arith.constant 0 : index
    %c0_3 = arith.constant 0 : index
    %2 = vector.load %arg2[%c0_2, %c0_3] : memref<8x128xf32, #tpu.memory_space<vmem>>, vector<8x128xf32>
    %cst = arith.constant dense<0.000000e+00> : vector<16x128xf32>
    %3 = tpu.matmul %1, %2, %cst {dimension_numbers = #tpu.dot_dimension_numbers<[1], [0], [0], [1], [0, 0, 1, 1], [], []>} : vector<16x8xf32>, vector<8x128xf32>, vector<16x128xf32> -> vector<16x128xf32>
    %c0_4 = arith.constant 0 : index
    %c0_5 = arith.constant 0 : index
    %4 = vector.load %arg4[%c0_4, %c0_5] : memref<1x128xf32, #tpu.memory_space<vmem>>, vector<1x128xf32>
    %5 = vector.broadcast %4 : vector<1x128xf32> to vector<16x128xf32>
    %6 = arith.addf %3, %5 : vector<16x128xf32>
    %c0_6 = arith.constant 0 : index
    %c0_7 = arith.constant 0 : index
    %7 = vector.load %arg6[%c0_6, %c0_7] : memref<16x128xf32, #tpu.memory_space<vmem>>, vector<16x128xf32>
    tpu.vector_store %arg6[%c0_6, %c0_7], %6 {strides = array<i32>} : memref<16x128xf32, #tpu.memory_space<vmem>>, vector<16x128xf32>,
    %cst_8 = arith.constant 0.000000e+00 : f32
    %8 = vector.broadcast %cst_8 : f32 to vector<1x32xf32>
    %c0_9 = arith.constant 0 : index
    %c0_10 = arith.constant 0 : index
    %9 = vector.load %arg7[%c0_9, %c0_10] : memref<1x32xf32, #tpu.memory_space<vmem>>, vector<1x32xf32>
    tpu.vector_store %arg7[%c0_9, %c0_10], %8 {strides = array<i32>} : memref<1x32xf32, #tpu.memory_space<vmem>>, vector<1x32xf32>,
    %cst_11 = arith.constant 0.000000e+00 : f32
    %10 = vector.broadcast %cst_11 : f32 to vector<1x32xf32>
    %c0_12 = arith.constant 0 : index
    %c0_13 = arith.constant 0 : index
    %11 = vector.load %arg8[%c0_12, %c0_13] : memref<1x32xf32, #tpu.memory_space<vmem>>, vector<1x32xf32>
    tpu.vector_store %arg8[%c0_12, %c0_13], %10 {strides = array<i32>} : memref<1x32xf32, #tpu.memory_space<vmem>>, vector<1x32xf32>,
    %12 = tpu.iota {dimensions = array<i32: 1>} : vector<1x128xi32>
    %c64_i32 = arith.constant 64 : i32
    %13 = vector.broadcast %c64_i32 : i32 to vector<1x128xi32>
    %14 = arith.cmpi sge, %12, %13 : vector<1x128xi32>
    %c96_i32 = arith.constant 96 : i32
    %15 = vector.broadcast %c96_i32 : i32 to vector<1x128xi32>
    %16 = arith.cmpi slt, %12, %15 : vector<1x128xi32>
    %17 = arith.andi %14, %16 : vector<1x128xi1>
    %c0_i32 = arith.constant 0 : i32
    %c16_i32 = arith.constant 16 : i32
    %18 = arith.addi %c0_i32, %c16_i32 : i32
    %c1_i32 = arith.constant 1 : i32
    scf.for %arg9 = %c0_i32 to %18 step %c1_i32  : i32 {
      %c1_i32_15 = arith.constant 1 : i32
      %19 = arith.muli %arg9, %c1_i32_15 : i32
      %c0_i32_16 = arith.constant 0 : i32
      %20 = arith.addi %c0_i32_16, %19 : i32
      %21 = arith.index_cast %20 : i32 to index
      %c0_17 = arith.constant 0 : index
      %22 = vector.load %arg6[%21, %c0_17] : memref<16x128xf32, #tpu.memory_space<vmem>>, vector<1x128xf32>
      %c0_18 = arith.constant 0 : index
      %c0_19 = arith.constant 0 : index
      %23 = vector.load %arg7[%c0_18, %c0_19] : memref<1x32xf32, #tpu.memory_space<vmem>>, vector<1x32xf32>
      %c0_20 = arith.constant 0 : index
      %c0_21 = arith.constant 0 : index
      %24 = vector.load %arg3[%c0_20, %c0_21] : memref<32x128xf32, #tpu.memory_space<vmem>>, vector<32x128xf32>
      %cst_22 = arith.constant dense<0.000000e+00> : vector<1x128xf32>
      %25 = tpu.matmul %23, %24, %cst_22 {dimension_numbers = #tpu.dot_dimension_numbers<[1], [0], [0], [1], [0, 0, 1, 1], [], []>} : vector<1x32xf32>, vector<32x128xf32>, vector<1x128xf32> -> vector<1x128xf32>
      %26 = arith.addf %22, %25 : vector<1x128xf32>
      %27 = math.tanh %26 : vector<1x128xf32>
      %28 = arith.negf %26 : vector<1x128xf32>
      %29 = math.exp %28 : vector<1x128xf32>
      %cst_23 = arith.constant 1.000000e+00 : f32
      %30 = vector.broadcast %cst_23 : f32 to vector<1x128xf32>
      %31 = arith.addf %30, %29 : vector<1x128xf32>
      %32 = arith.divf %30, %31 : vector<1x128xf32>
      %33 = arith.select %17, %27, %32 : vector<1x128xi1>, vector<1x128xf32>
      %34 = vector.extract_strided_slice %33 {offsets = [0, 0], sizes = [1, 32], strides = [1, 1]} : vector<1x128xf32> to vector<1x32xf32>
      %35 = vector.extract_strided_slice %33 {offsets = [0, 32], sizes = [1, 32], strides = [1, 1]} : vector<1x128xf32> to vector<1x32xf32>
      %36 = vector.extract_strided_slice %33 {offsets = [0, 64], sizes = [1, 32], strides = [1, 1]} : vector<1x128xf32> to vector<1x32xf32>
      %37 = vector.extract_strided_slice %33 {offsets = [0, 96], sizes = [1, 32], strides = [1, 1]} : vector<1x128xf32> to vector<1x32xf32>
      %c0_24 = arith.constant 0 : index
      %c0_25 = arith.constant 0 : index
      %38 = vector.load %arg8[%c0_24, %c0_25] : memref<1x32xf32, #tpu.memory_space<vmem>>, vector<1x32xf32>
      %39 = arith.mulf %35, %38 : vector<1x32xf32>
      %40 = arith.mulf %34, %36 : vector<1x32xf32>
      %41 = arith.addf %39, %40 : vector<1x32xf32>
      %42 = math.tanh %41 : vector<1x32xf32>
      %43 = arith.mulf %37, %42 : vector<1x32xf32>
      %c0_26 = arith.constant 0 : index
      %c0_27 = arith.constant 0 : index
      %44 = vector.load %arg8[%c0_26, %c0_27] : memref<1x32xf32, #tpu.memory_space<vmem>>, vector<1x32xf32>
      tpu.vector_store %arg8[%c0_26, %c0_27], %41 {strides = array<i32>} : memref<1x32xf32, #tpu.memory_space<vmem>>, vector<1x32xf32>,
      %c0_28 = arith.constant 0 : index
      %c0_29 = arith.constant 0 : index
      %45 = vector.load %arg7[%c0_28, %c0_29] : memref<1x32xf32, #tpu.memory_space<vmem>>, vector<1x32xf32>
      tpu.vector_store %arg7[%c0_28, %c0_29], %43 {strides = array<i32>} : memref<1x32xf32, #tpu.memory_space<vmem>>, vector<1x32xf32>,
      %46 = vector.shape_cast %43 : vector<1x32xf32> to vector<1x1x32xf32>
      %c0_30 = arith.constant 0 : index
      %47 = arith.index_cast %20 : i32 to index
      %c0_31 = arith.constant 0 : index
      %48 = vector.load %arg5[%c0_30, %47, %c0_31] : memref<1x16x32xf32, #tpu.memory_space<vmem>>, vector<1x1x32xf32>
      tpu.vector_store %arg5[%c0_30, %47, %c0_31], %46 {strides = array<i32>} : memref<1x16x32xf32, #tpu.memory_space<vmem>>, vector<1x1x32xf32>,
    }
    %c16_i32_14 = arith.constant 16 : i32
    return
  }
  func.func @transform_0(%arg0: i32) -> (i32, i32, i32) {
    %c0_i32 = arith.constant 0 : i32
    %c0_i32_0 = arith.constant 0 : i32
    %c0_i32_1 = arith.constant 0 : i32
    return %arg0, %c0_i32, %c0_i32_0 : i32, i32, i32
  }
  func.func @transform_1(%arg0: i32) -> (i32, i32) {
    %c0_i32 = arith.constant 0 : i32
    %c0_i32_0 = arith.constant 0 : i32
    %c0_i32_1 = arith.constant 0 : i32
    return %c0_i32, %c0_i32_0 : i32, i32
  }
  func.func @transform_2(%arg0: i32) -> (i32, i32) {
    %c0_i32 = arith.constant 0 : i32
    %c0_i32_0 = arith.constant 0 : i32
    %c0_i32_1 = arith.constant 0 : i32
    return %c0_i32, %c0_i32_0 : i32, i32
  }
  func.func @transform_3(%arg0: i32) -> (i32, i32) {
    %c0_i32 = arith.constant 0 : i32
    %c0_i32_0 = arith.constant 0 : i32
    %c0_i32_1 = arith.constant 0 : i32
    return %c0_i32, %c0_i32_0 : i32, i32
  }
  func.func @transform_4(%arg0: i32) -> (i32, i32, i32) {
    %c0_i32 = arith.constant 0 : i32
    %c0_i32_0 = arith.constant 0 : i32
    %c0_i32_1 = arith.constant 0 : i32
    return %arg0, %c0_i32, %c0_i32_0 : i32, i32, i32
  }
}

</mosaic_0001>

<llo_original>
// kernel: tpu_custom_call.1
$region0: #{tpu_custom_call.1}
  #allocation0 [shape = 'u32[]', space=smem, size = 0x4, offset = 0x4, fixed_abs, tag = 'smem constant byte address 0x4 - core index']
  #allocation1 [shape = 'u32[144,128]{1,0:T(1,128)}', space=vmem, size = 0x12000, scoped, tag = 'internal scratch']
  #allocation2 [shape = 'f32[16,128]{1,0:T(8,128)}', space=vmem, size = 0x2000, scoped, tag = 'scratch operand']
  #allocation3 [shape = 'f32[1,32]{1,0:T(1,128)}', space=vmem, size = 0x200, scoped, tag = 'scratch operand']
  #allocation4 [shape = 'f32[1,32]{1,0:T(1,128)}', space=vmem, size = 0x200, scoped, tag = 'scratch operand']
  %s0 = inlined_call_operand.vmem [shape: f32[2,16,8], index: 0, kind: input, shape index: {}]
  %s1 = inlined_call_operand.vmem [shape: f32[8,128], index: 1, kind: input, shape index: {}]
  %s2 = inlined_call_operand.vmem [shape: f32[32,128], index: 2, kind: input, shape index: {}]
  %s3 = inlined_call_operand.vmem [shape: f32[1,128], index: 3, kind: input, shape index: {}]
  %s4 = inlined_call_operand.hbm [shape: f32[2,16,32], index: 4, kind: output, shape index: {}]
  %s5 = sld [smem:[#allocation0]]
  $region56: #{tpu_custom_call.1} parent=0
    _
  %s7 = ssub.s32 1, %s5
  %s8 = scalar_select 0, %s7, %s5
  $region1: #{tpu_custom_call.1} parent=0
    #allocation5 [shape = 'u8[16384]{0}', space=vmem, size = 0x4000, scoped, tag = 'output window, operand 0']
    #allocation6 [shape = 's32[2]{0}', space=sflag, size = 0x8, scoped, tag = 'scoped memory for tpu_custom_call.1']
    %9 = vsyncpa [#allocation6], 0
    %s10 = scalar_lea.sflag [#allocation6], 1
    %11 = vsyncpa %s10, 0
    loop: start=0, step=1, limit=4
    $region2: #{tpu_custom_call.1} parent=1 // loop_pre_header
      _
    $region3: #{tpu_custom_call.1} parent=1 // loop_header
      %s13 = sphi 0, %s17
      %p14 = scmp.ge.s32.totalorder %s13, 4
      %s23 = sphi 0, %s25
      %s26 = sphi 0, %s23
      %s27 = sphi 0, %s26
      %s43 = sphi 0, %s27
      %s47 = sphi 0, %s47
      %s49 = sphi 0, %s47
      %s50 = sphi 0, %s49
      %s64 = sphi 0, %s50
      %s68 = sphi 0, %s68
      %s70 = sphi 0, %s68
      %s71 = sphi 0, %s70
      %s85 = sphi 0, %s71
      %s89 = sphi 0, %s89
      %s91 = sphi 0, %s89
      %s92 = sphi 0, %s91
      %s106 = sphi 0, %s92
      %s112 = sphi 0, %s114
      %s115 = sphi 0, %s112
      %s116 = sphi 0, %s115
      %s132 = sphi 0, %s116
    $region4: #{tpu_custom_call.1} parent=1 // loop_header_branch
      %16 = sbr.rel (%p14) target = $region8
    $region5: #{tpu_custom_call.1} parent=1 // loop_body
      %s18 = ssub.s32 %s13, 1
      %s19 = ssub.s32 %s13, 2
      %s20 = sadd.s32 %s13, 1
      %s21 = ssub.s32 %s13, %s20
      %p22 = scmp.eq.s32.totalorder %s21, 0
      %s24 = sadd.s32 %s23, 1
      %s25 = scalar_select %p22, %s23, %s24
      %p28 = pneg %p22
      %p29 = scmp.eq.s32.totalorder %s13, 1
      %p30 = por %p28, %p29
      %p31 = scmp.ne.s32.totalorder %s23, %s26
      %p32 = scmp.eq.s32.totalorder %s13, 0
      %p33 = por %p31, %p32
      %p34 = scmp.ne.s32.totalorder %s23, %s26
      %p35 = scmp.eq.s32.totalorder %s18, 1
      %p36 = por %p34, %p35
      %p37 = scmp.ne.s32.totalorder %s26, %s27
      %p38 = scmp.eq.s32.totalorder %s18, 0
      %p39 = por %p37, %p38
      %p40 = scmp.ne.s32.totalorder %s26, %s27
      %p41 = scmp.eq.s32.totalorder %s19, 1
      %p42 = por %p40, %p41
      %p44 = scmp.ne.s32.totalorder %s27, %s43
      %p45 = scmp.eq.s32.totalorder %s19, 0
      %p46 = por %p44, %p45
      %s48 = sadd.s32 %s47, 1
      %p51 = scmp.eq.s32.totalorder %s13, 1
      %p52 = scmp.ne.s32.totalorder %s47, %s49
      %p53 = scmp.eq.s32.totalorder %s13, 0
      %p54 = por %p52, %p53
      %p55 = scmp.ne.s32.totalorder %s47, %s49
      %p56 = scmp.eq.s32.totalorder %s18, 1
      %p57 = por %p55, %p56
      %p58 = scmp.ne.s32.totalorder %s49, %s50
      %p59 = scmp.eq.s32.totalorder %s18, 0
      %p60 = por %p58, %p59
      %p61 = scmp.ne.s32.totalorder %s49, %s50
      %p62 = scmp.eq.s32.totalorder %s19, 1
      %p63 = por %p61, %p62
      %p65 = scmp.ne.s32.totalorder %s50, %s64
      %p66 = scmp.eq.s32.totalorder %s19, 0
      %p67 = por %p65, %p66
      %s69 = sadd.s32 %s68, 1
      %p72 = scmp.eq.s32.totalorder %s13, 1
      %p73 = scmp.ne.s32.totalorder %s68, %s70
      %p74 = scmp.eq.s32.totalorder %s13, 0
      %p75 = por %p73, %p74
      %p76 = scmp.ne.s32.totalorder %s68, %s70
      %p77 = scmp.eq.s32.totalorder %s18, 1
      %p78 = por %p76, %p77
      %p79 = scmp.ne.s32.totalorder %s70, %s71
      %p80 = scmp.eq.s32.totalorder %s18, 0
      %p81 = por %p79, %p80
      %p82 = scmp.ne.s32.totalorder %s70, %s71
      %p83 = scmp.eq.s32.totalorder %s19, 1
      %p84 = por %p82, %p83
      %p86 = scmp.ne.s32.totalorder %s71, %s85
      %p87 = scmp.eq.s32.totalorder %s19, 0
      %p88 = por %p86, %p87
      %s90 = sadd.s32 %s89, 1
      %p93 = scmp.eq.s32.totalorder %s13, 1
      %p94 = scmp.ne.s32.totalorder %s89, %s91
      %p95 = scmp.eq.s32.totalorder %s13, 0
      %p96 = por %p94, %p95
      %p97 = scmp.ne.s32.totalorder %s89, %s91
      %p98 = scmp.eq.s32.totalorder %s18, 1
      %p99 = por %p97, %p98
      %p100 = scmp.ne.s32.totalorder %s91, %s92
      %p101 = scmp.eq.s32.totalorder %s18, 0
      %p102 = por %p100, %p101
      %p103 = scmp.ne.s32.totalorder %s91, %s92
      %p104 = scmp.eq.s32.totalorder %s19, 1
      %p105 = por %p103, %p104
      %p107 = scmp.ne.s32.totalorder %s92, %s106
      %p108 = scmp.eq.s32.totalorder %s19, 0
      %p109 = por %p107, %p108
      %s110 = ssub.s32 %s13, %s20
      %p111 = scmp.eq.s32.totalorder %s110, 0
      %s113 = sadd.s32 %s112, 1
      %s114 = scalar_select %p111, %s112, %s113
      %p117 = pneg %p111
      %p118 = scmp.eq.s32.totalorder %s13, 1
      %p119 = por %p117, %p118
      %p120 = scmp.ne.s32.totalorder %s112, %s115
      %p121 = scmp.eq.s32.totalorder %s13, 0
      %p122 = por %p120, %p121
      %p123 = scmp.ne.s32.totalorder %s112, %s115
      %p124 = scmp.eq.s32.totalorder %s18, 1
      %p125 = por %p123, %p124
      %p126 = scmp.ne.s32.totalorder %s115, %s116
      %p127 = scmp.eq.s32.totalorder %s18, 0
      %p128 = por %p126, %p127
      %p129 = scmp.ne.s32.totalorder %s115, %s116
      %p130 = scmp.eq.s32.totalorder %s19, 1
      %p131 = por %p129, %p130
      %p133 = scmp.ne.s32.totalorder %s116, %s132
      %p134 = scmp.eq.s32.totalorder %s19, 0
      %p135 = por %p133, %p134
      %p136 = scmp.le.s32.totalorder 1, %s13
      %p137 = scmp.lt.s32.totalorder %s13, 3
      %p138 = pnand %p136, %p137
      %p139 = pneg %p138
      // Predicated region
      $region9: #{tpu_custom_call.1} parent=5 // pred_check
        _
      $region10: #{tpu_custom_call.1} parent=5 // pred_check_branch
        %141 = sbr.rel (%p138) target = $region12
      $region11: #{tpu_custom_call.1} parent=5 // pred_region
        %s142 = ssub.s32 %s13, 1
        // Predicated region
        $region13: #{tpu_custom_call.1} parent=11 // pred_check
          %p143 = pneg %p60
        $region14: #{tpu_custom_call.1} parent=11 // pred_check_branch
          %145 = sbr.rel (%p143) target = $region16
        $region15: #{tpu_custom_call.1} parent=11 // pred_region
          _
        $region16: #{tpu_custom_call.1} parent=11 // pred_fallthru
          _
        // Predicated region
        $region17: #{tpu_custom_call.1} parent=11 // pred_check
          %p146 = pneg %p81
        $region18: #{tpu_custom_call.1} parent=11 // pred_check_branch
          %148 = sbr.rel (%p146) target = $region20
        $region19: #{tpu_custom_call.1} parent=11 // pred_region
          _
        $region20: #{tpu_custom_call.1} parent=11 // pred_fallthru
          _
        // Predicated region
        $region21: #{tpu_custom_call.1} parent=11 // pred_check
          %p149 = pneg %p102
        $region22: #{tpu_custom_call.1} parent=11 // pred_check_branch
          %151 = sbr.rel (%p149) target = $region24
        $region23: #{tpu_custom_call.1} parent=11 // pred_region
          _
        $region24: #{tpu_custom_call.1} parent=11 // pred_fallthru
          _
      $region12: #{tpu_custom_call.1} parent=5 // pred_fallthru
        _
      %p152 = scmp.lt.s32.totalorder %s13, 2
      // Predicated region
      $region25: #{tpu_custom_call.1} parent=5 // pred_check
        %p153 = pneg %p152
      $region26: #{tpu_custom_call.1} parent=5 // pred_check_branch
        %155 = sbr.rel (%p153) target = $region28
      $region27: #{tpu_custom_call.1} parent=5 // pred_region
        // Predicated region
        $region29: #{tpu_custom_call.1} parent=27 // pred_check
          %p156 = pneg %p33
        $region30: #{tpu_custom_call.1} parent=27 // pred_check_branch
          %158 = sbr.rel (%p156) target = $region32
        $region31: #{tpu_custom_call.1} parent=27 // pred_region
          %p159 = scmp.lt.s32.totalorder %s13, 1
          %s160 = scalar_select %p159, %s13, 1
          %s161 = smul.addr %s160, 2
          %s162 = smul.addr %s161, 8
          %s163 = scalar_lea.vmem %s0, %s162
        $region32: #{tpu_custom_call.1} parent=27 // pred_fallthru
          _
      $region28: #{tpu_custom_call.1} parent=5 // pred_fallthru
        _
      %p164 = scmp.le.s32.totalorder 1, %s13
      %p165 = scmp.lt.s32.totalorder %s13, 3
      %p166 = pnand %p164, %p165
      %p167 = pneg %p166
      // Predicated region
      $region33: #{tpu_custom_call.1} parent=5 // pred_check
        _
      $region34: #{tpu_custom_call.1} parent=5 // pred_check_branch
        %169 = sbr.rel (%p166) target = $region36
      $region35: #{tpu_custom_call.1} parent=5 // pred_region
        %s170 = ssub.s32 %s13, 1
        %p171 = scmp.lt.s32.totalorder %s18, 1
        %s172 = scalar_select %p171, %s18, 1
        %s173 = smul.addr %s172, 2
        %s174 = smul.addr %s173, 8
        %s175 = scalar_lea.vmem %s0, %s174
        %p176 = pneg %p39
        %p177 = pneg %p36
        %p178 = pneg %p60
        %p179 = pneg %p57
        %p180 = pneg %p81
        %p181 = pneg %p78
        %p182 = pneg %p102
        %p183 = pneg %p99
        %p184 = pneg %p128
        %p185 = pneg %p125
        %s186 = sand.u32 %s115, 1
        %s187 = scalar_lea.sflag [#allocation6], %s186
        %s188 = sand.u32 %s115, 1
        %s189 = smul.addr %s188, 16
        %s190 = scalar_lea.vmem [#allocation5], %s189
        %p191 = scmp.lt.s32.totalorder %s18, 1
        %s192 = scalar_select %p191, %s18, 1
        %s193 = smul.addr %s192, 2
        %s194 = smul.addr %s193, 8
        %s195 = scalar_lea.vmem %s0, %s194
        %v196 = vld [vmem:[%s195] sm:$0xff]
        %v197 = vld [vmem:[%s195 + $0x8] sm:$0xff]
        %v198 = vld [vmem:[%s1] sm:$0xff]
        %v199 = vld [vmem:[%s3] sm:$0x1]
        %v201 = vlaneseq
        %v202 = vshrl.u32 %v201, 7
        %v203 = vsub.s32 0, %v202
        %v204 = vrot.slane %v199, %v203
        %vm206 = vcmask 64512
        %v208 = vsel %vm206, %v196, 0
        %v211 = vsel %vm206, %v197, 0
        %213 = vmatprep.subr.mxu0 0.0
        %214 = vmatpush1.msra.mxu0 %v198
        %215 = vmatprep.subr.mxu0 0.0
        %216 = vmatpush1.msra.mxu0 0.0
        %217 = vmatprep.subr.mxu0 0.0
        %218 = vmatpush1.msra.mxu0 0.0
        %219 = vmatprep.subr.mxu0 0.0
        %220 = vmatpush1.msra.mxu0 0.0
        %221 = vmatprep.subr.mxu0 0.0
        %222 = vmatpush1.msra.mxu0 0.0
        %223 = vmatprep.subr.mxu0 0.0
        %224 = vmatpush1.msra.mxu0 0.0
        %225 = vmatprep.subr.mxu0 0.0
        %226 = vmatpush1.msra.mxu0 0.0
        %227 = vmatprep.subr.mxu0 0.0
        %228 = vmatpush1.msra.mxu0 0.0
        %229 = vmatprep.subr.mxu0 0.0
        %230 = vmatpush1.msra.mxu0 0.0
        %231 = vmatprep.subr.mxu0 0.0
        %232 = vmatpush1.msra.mxu0 0.0
        %233 = vmatprep.subr.mxu0 0.0
        %234 = vmatpush1.msra.mxu0 0.0
        %235 = vmatprep.subr.mxu0 0.0
        %236 = vmatpush1.msra.mxu0 0.0
        %237 = vmatprep.subr.mxu0 0.0
        %238 = vmatpush1.msra.mxu0 0.0
        %239 = vmatprep.subr.mxu0 0.0
        %240 = vmatpush1.msra.mxu0 0.0
        %241 = vmatprep.subr.mxu0 0.0
        %242 = vmatpush1.msra.mxu0 0.0
        %243 = vmatprep.subr.mxu0 0.0
        %244 = vmatpush1.msra.mxu0 0.0
        %245 = vmatprep.subr.mxu0 0.0
        %246 = vmatpush1.msra.mxu0 0.0
        %247 = vmatprep.subr.mxu0 0.0
        %248 = vmatpush1.msra.mxu0 0.0
        %249 = vmatprep.subr.mxu0 0.0
        %250 = vmatpush1.msra.mxu0 0.0
        %251 = vmatprep.subr.mxu0 0.0
        %252 = vmatpush1.msra.mxu0 0.0
        %253 = vmatprep.subr.mxu0 0.0
        %254 = vmatpush1.msra.mxu0 0.0
        %255 = vmatprep.subr.mxu0 0.0
        %256 = vmatpush1.msra.mxu0 0.0
        %257 = vmatprep.subr.mxu0 0.0
        %258 = vmatpush1.msra.mxu0 0.0
        %259 = vmatprep.subr.mxu0 0.0
        %260 = vmatpush1.msra.mxu0 0.0
        %261 = vmatprep.subr.mxu0 0.0
        %262 = vmatpush1.msra.mxu0 0.0
        %263 = vmatprep.subr.mxu0 0.0
        %264 = vmatpush1.msra.mxu0 0.0
        %265 = vmatprep.subr.mxu0 0.0
        %266 = vmatpush1.msra.mxu0 0.0
        %267 = vmatprep.subr.mxu0 0.0
        %268 = vmatpush1.msra.mxu0 0.0
        %269 = vmatprep.subr.mxu0 0.0
        %270 = vmatpush1.msra.mxu0 0.0
        %271 = vmatprep.subr.mxu0 0.0
        %272 = vmatpush1.msra.mxu0 0.0
        %273 = vmatprep.subr.mxu0 0.0
        %274 = vmatpush1.msra.mxu0 0.0
        %275 = vmatprep.subr.mxu0 0.0
        %276 = vmatpush1.msra.mxu0 0.0
        %277 = vmatprep.mubr.f32.mxu0 0.0
        %278 = vmatmul.mubr.f32.gmra.mrb[0].mxu0 %v208
        %v279 = vpop.f32.mrb[0].mxu0
        %v280 = vadd.f32 %v204, %v279
        %v281 = vpop.f32.mrb[0].mxu0
        %282 = vmatprep.mubr.f32.mxu0 0.0
        %283 = vmatmul.mubr.f32.gmra.mrb[0].mxu0 %v211
        %v284 = vpop.f32.mrb[0].mxu0
        %v285 = vadd.f32 %v204, %v284
        %v286 = vpop.f32.mrb[0].mxu0
        %287 = vdwg.mxu0
        %288 = vst [vmem:[#allocation2] sm:$0xff] %v280
        %289 = vst [vmem:[#allocation2 + $0x8] sm:$0xff] %v285
        %vm290 = vcmask 253952
        %291 = vst.msk [vmem:[#allocation3] sm:$0x1] %vm290, 0.0
        %292 = vst.msk [vmem:[#allocation4] sm:$0x1] %vm290, 0.0
        %v293 = vlaneseq
        %v294 = vand.u32 %v293, 127
        %vm295 = vcmp.ge.s32.totalorder %v294, 64
        %vm296 = vcmp.lt.s32.totalorder %v294, 96
        %vm297 = vmand %vm295, %vm296
        loop: start=0, step=1, limit=16
        $region37: #{tpu_custom_call.1} parent=35 // loop_pre_header
          _
        $region38: #{tpu_custom_call.1} parent=35 // loop_header
          %s299 = sphi 0, %s303
          %p300 = scmp.ge.s32.totalorder %s299, 16
        $region39: #{tpu_custom_call.1} parent=35 // loop_header_branch
          %302 = sbr.rel (%p300) target = $region43
        $region40: #{tpu_custom_call.1} parent=35 // loop_body
          %s304 = scalar_lea.vmem [#allocation2], %s299
          %v305 = vld [vmem:[%s304] sm:$0x1]
          %v306 = vld [vmem:[#allocation3] sm:$0x1]
          %v307 = vld [vmem:[%s2] sm:$0xff]
          %v308 = vld [vmem:[%s2 + $0x8] sm:$0xff]
          %v309 = vld [vmem:[%s2 + $0x10] sm:$0xff]
          %v310 = vld [vmem:[%s2 + $0x18] sm:$0xff]
          %vm311 = vcmask 261120
          %v313 = vsel %vm311, %v306, 0
          %315 = vmatprep.subr.mxu0 0.0
          %316 = vmatpush1.msra.mxu0 %v307
          %317 = vmatprep.subr.mxu0 0.0
          %318 = vmatpush1.msra.mxu0 %v308
          %319 = vmatprep.subr.mxu0 0.0
          %320 = vmatpush1.msra.mxu0 %v309
          %321 = vmatprep.subr.mxu0 0.0
          %322 = vmatpush1.msra.mxu0 %v310
          %323 = vmatprep.subr.mxu0 0.0
          %324 = vmatpush1.msra.mxu0 0.0
          %325 = vmatprep.subr.mxu0 0.0
          %326 = vmatpush1.msra.mxu0 0.0
          %327 = vmatprep.subr.mxu0 0.0
          %328 = vmatpush1.msra.mxu0 0.0
          %329 = vmatprep.subr.mxu0 0.0
          %330 = vmatpush1.msra.mxu0 0.0
          %331 = vmatprep.subr.mxu0 0.0
          %332 = vmatpush1.msra.mxu0 0.0
          %333 = vmatprep.subr.mxu0 0.0
          %334 = vmatpush1.msra.mxu0 0.0
          %335 = vmatprep.subr.mxu0 0.0
          %336 = vmatpush1.msra.mxu0 0.0
          %337 = vmatprep.subr.mxu0 0.0
          %338 = vmatpush1.msra.mxu0 0.0
          %339 = vmatprep.subr.mxu0 0.0
          %340 = vmatpush1.msra.mxu0 0.0
          %341 = vmatprep.subr.mxu0 0.0
          %342 = vmatpush1.msra.mxu0 0.0
          %343 = vmatprep.subr.mxu0 0.0
          %344 = vmatpush1.msra.mxu0 0.0
          %345 = vmatprep.subr.mxu0 0.0
          %346 = vmatpush1.msra.mxu0 0.0
          %347 = vmatprep.subr.mxu0 0.0
          %348 = vmatpush1.msra.mxu0 0.0
          %349 = vmatprep.subr.mxu0 0.0
          %350 = vmatpush1.msra.mxu0 0.0
          %351 = vmatprep.subr.mxu0 0.0
          %352 = vmatpush1.msra.mxu0 0.0
          %353 = vmatprep.subr.mxu0 0.0
          %354 = vmatpush1.msra.mxu0 0.0
          %355 = vmatprep.subr.mxu0 0.0
          %356 = vmatpush1.msra.mxu0 0.0
          %357 = vmatprep.subr.mxu0 0.0
          %358 = vmatpush1.msra.mxu0 0.0
          %359 = vmatprep.subr.mxu0 0.0
          %360 = vmatpush1.msra.mxu0 0.0
          %361 = vmatprep.subr.mxu0 0.0
          %362 = vmatpush1.msra.mxu0 0.0
          %363 = vmatprep.subr.mxu0 0.0
          %364 = vmatpush1.msra.mxu0 0.0
          %365 = vmatprep.subr.mxu0 0.0
          %366 = vmatpush1.msra.mxu0 0.0
          %367 = vmatprep.subr.mxu0 0.0
          %368 = vmatpush1.msra.mxu0 0.0
          %369 = vmatprep.subr.mxu0 0.0
          %370 = vmatpush1.msra.mxu0 0.0
          %371 = vmatprep.subr.mxu0 0.0
          %372 = vmatpush1.msra.mxu0 0.0
          %373 = vmatprep.subr.mxu0 0.0
          %374 = vmatpush1.msra.mxu0 0.0
          %375 = vmatprep.subr.mxu0 0.0
          %376 = vmatpush1.msra.mxu0 0.0
          %377 = vmatprep.subr.mxu0 0.0
          %378 = vmatpush1.msra.mxu0 0.0
          %379 = vmatprep.mubr.f32.mxu0 0.0
          %380 = vmatmul.mubr.f32.gmra.mrb[0].mxu0 %v313
          %v381 = vpop.f32.mrb[0].mxu0
          %v382 = vadd.f32 0.0, %v381
          %v383 = vpop.f32.mrb[0].mxu0
          %384 = vdwg.mxu0
          %v385 = vadd.f32 %v305, %v382
          %v386 = vtanh.pop %v385
          %v387 = vxor.u32 %v385, 2147483648
          %v388 = vmul.f32 %v387, 1.442695
          %v389 = vpow.pop %v388
          %v390 = vadd.f32 %v389, 1.0
          %v391 = vrcp.pop %v390
          %v392 = vmul.f32 1.0, %v391
          %v393 = vsel %vm297, %v386, %v392
          %v394 = vld [vmem:[#allocation4] sm:$0x1]
          %v396 = vlaneseq
          %v397 = vshrl.u32 %v396, 7
          %v398 = vsub.s32 0, %v397
          %v399 = vrot.slane %v394, %v398
          %400 = vrot.lane.b32.xlu0 %v399, 32
          %v401 = vpop.permute.xlu0 %400
          %v403 = vmul.f32 %v393, %v401
          %405 = vrot.lane.b32.xlu0 %v393, 64
          %v406 = vpop.permute.xlu0 %405
          %v408 = vmul.f32 %v393, %v406
          %410 = vrot.lane.b32.xlu0 %v408, 32
          %v411 = vpop.permute.xlu0 %410
          %v413 = vadd.f32 %v403, %v411
          %v414 = vtanh.pop %v413
          %416 = vrot.lane.b32.xlu0 %v414, 64
          %v417 = vpop.permute.xlu0 %416
          %v419 = vmul.f32 %v393, %v417
          %421 = vrot.lane.b32.xlu0 %v413, 96
          %v422 = vpop.permute.xlu0 %421
          %424 = vst.msk [vmem:[#allocation4] sm:$0x1] %vm290, %v422
          %426 = vrot.lane.b32.xlu0 %v419, 32
          %v427 = vpop.permute.xlu0 %426
          %429 = vst.msk [vmem:[#allocation3] sm:$0x1] %vm290, %v427
          %s430 = scalar_lea.vmem %s190, %s299 [#allocation5]
          %431 = vst.msk [vmem:[%s430] sm:$0x1] %vm290, %v427
        $region41: #{tpu_custom_call.1} parent=35 // loop_footer
          %s303 = sadd.s32 1, %s299
        $region42: #{tpu_custom_call.1} parent=35 // loop_footer_branch
          %298 = sbr.rel target = $region38
        $region43: #{tpu_custom_call.1} parent=35 // loop_exit
          _
        %s432 = sand.u32 %s115, 1
        %s433 = scalar_lea.sflag [#allocation6], %s432
        %s434 = sand.u32 %s115, 1
        %s435 = smul.addr %s434, 16
        %s436 = scalar_lea.vmem [#allocation5], %s435
        // Predicated region
        $region44: #{tpu_custom_call.1} parent=35 // pred_check
          %p437 = pneg %p125
        $region45: #{tpu_custom_call.1} parent=35 // pred_check_branch
          %439 = sbr.rel (%p437) target = $region47
        $region46: #{tpu_custom_call.1} parent=35 // pred_region
          %s441 = ssub.s32 256, 256
          %442 = vsyncadd %s433, %s441
          %s443 = smul.addr %s18, 2
          %s444 = smul.addr %s443, 128
          %s445 = scalar_lea.hbm %s4, %s444
          %s446 = sshll.u32 %s436, 4
          %s447 = int_to_ptr.vmem [resolvable:$true] %s446
          %452 = dma.vmem_to_hbm [thread:$0]  %s447, 256, %s445, %s433, 128, 128, 8
        $region47: #{tpu_custom_call.1} parent=35 // pred_fallthru
          _
      $region36: #{tpu_custom_call.1} parent=5 // pred_fallthru
        _
      %p453 = scmp.le.s32.totalorder 2, %s13
      // Predicated region
      $region48: #{tpu_custom_call.1} parent=5 // pred_check
        %p454 = pneg %p453
      $region49: #{tpu_custom_call.1} parent=5 // pred_check_branch
        %456 = sbr.rel (%p454) target = $region51
      $region50: #{tpu_custom_call.1} parent=5 // pred_region
        %s457 = ssub.s32 %s13, 2
        // Predicated region
        $region52: #{tpu_custom_call.1} parent=50 // pred_check
          %p458 = pneg %p131
        $region53: #{tpu_custom_call.1} parent=50 // pred_check_branch
          %460 = sbr.rel (%p458) target = $region55
        $region54: #{tpu_custom_call.1} parent=50 // pred_region
          %s461 = sand.u32 %s116, 1
          %s462 = scalar_lea.sflag [#allocation6], %s461
          %s463 = sand.u32 %s116, 1
          %s464 = smul.addr %s463, 16
          %s465 = scalar_lea.vmem [#allocation5], %s464
          %466 = dma.done %s462, 256
        $region55: #{tpu_custom_call.1} parent=50 // pred_fallthru
          _
      $region51: #{tpu_custom_call.1} parent=5 // pred_fallthru
        _
    $region6: #{tpu_custom_call.1} parent=1 // loop_footer
      %s17 = sadd.s32 1, %s13
    $region7: #{tpu_custom_call.1} parent=1 // loop_footer_branch
      %12 = sbr.rel target = $region3
    $region8: #{tpu_custom_call.1} parent=1 // loop_exit
      _
    %467 = vsyncpa [#allocation6], 1
    %s468 = scalar_lea.sflag [#allocation6], 1
    %469 = vsyncpa %s468, 1

</llo_original>
